<compile_context>
chip_gen: v5e
topology: v5e:2x2
jax: 0.10.0
libtpu: 0.0.40
codegen_flags: <defaults>
</compile_context>

<pallas_src>
import math

import jax
import jax.numpy as jnp
from jax.experimental import pallas as pl
from jax.experimental.pallas import tpu as pltpu

_INV_SQRT2 = 1.0 / math.sqrt(2.0)
LANES = 128  # TPU lane width; output / hidden padding granularity.


def _gelu_exact(x):
    # Exact (erf-based) GELU, matching PyTorch's default F.gelu / ACT2FN["gelu"].
    return 0.5 * x * (1.0 + jax.lax.erf(x * _INV_SQRT2))


def _round_up(n, m):
    return ((n + m - 1) // m) * m


def _tpu_caps():
    """Returns (vmem_capacity_bytes_per_core, num_tensorcores) with safe fallbacks."""
    vmem_bytes = 128 * 1024 * 1024
    num_cores = 1
    try:
        info = pltpu.get_tpu_info()
        vmem_bytes = int(getattr(info, "vmem_capacity_bytes", vmem_bytes))
        num_cores = int(getattr(info, "num_cores", num_cores))
    except Exception:
        pass
    # Heuristic: chips with <=64 MiB VMEM per core (v7x) have 2 TensorCores per chip.
    if vmem_bytes <= 64 * 1024 * 1024 and num_cores < 2:
        num_cores = 2
    return vmem_bytes, num_cores


def cls_head_kernel(x_ref, w1_ref, b1_ref, w2_ref, b2_ref, o_ref):
    # x_ref:  (tm, D)          activations in their storage dtype (e.g. f32)
    # w1_ref: (D, Hp)          layer-1 weight, pre-transposed, hidden padded to Hp
    # b1_ref: (1, Hp)  f32     layer-1 bias
    # w2_ref: (Hp, LANES)      layer-2 weight, lane-dense (real column 0, rest zeros)
    # b2_ref: (1, LANES) f32   layer-2 bias   (real column 0, rest zeros)
    # o_ref:  (tm, LANES)      lane-dense output block
    #
    # NOTE(correctness invariant): every output row depends only on its own input row;
    # the ragged last row-block therefore tolerates undefined data in its out-of-bounds
    # rows (those output rows are dropped by Pallas). Any future cross-row reduction
    # (layernorm / softmax / mean-pool) would silently break this.
    x = x_ref[...].astype(w1_ref.dtype)   # in-VMEM cast: stream f32 x, feed bf16 MXU
    h = jnp.dot(x, w1_ref[...], preferred_element_type=jnp.float32)
    h = _gelu_exact(h + b1_ref[...])      # f32 bias + exact GELU on the f32 accumulator
    y = jnp.dot(h.astype(w2_ref.dtype), w2_ref[...],
                preferred_element_type=jnp.float32)
    o_ref[...] = (y + b2_ref[...]).astype(o_ref.dtype)


def prepare_params(w1, b1, w2, b2, *, compute_dtype=jnp.bfloat16, lane_multiple=LANES):
    """One-time weight prep (do this at init, not per forward call).

    Inputs use PyTorch nn.Linear convention: w1 (H, D), b1 (H,), w2 (1, H), b2 (1,).
    Returns (w1_t (D, Hp), b1_r (1, Hp) f32, w2_t (Hp, LANES), b2_r (1, LANES) f32),
    with the hidden dim zero-padded to a multiple of `lane_multiple`. Padded hidden
    units have zero weight and zero bias -> gelu(0)=0 -> contribute exactly 0.

    Default compute_dtype is bf16 (native MXU dtype on all gens, f32 accumulation);
    pass jnp.float32 for bitwise-closer parity with the PyTorch f32 forward.
    `lane_multiple=256` slightly helps the 2x256^2 MXU on v6e/v7x when hidden%256==128.
    """
    hidden, input_dim = w1.shape
    wdt = compute_dtype if compute_dtype is not None else w1.dtype
    h_pad = _round_up(hidden, lane_multiple)

    w1_t = jnp.zeros((input_dim, h_pad), wdt).at[:, :hidden].set(w1.T.astype(wdt))
    b1_r = jnp.zeros((1, h_pad), jnp.float32).at[:, :hidden].set(b1.astype(jnp.float32))
    # Lane-dense layer 2: the real logit lives in column 0, columns 1..127 are zeros.
    w2_t = jnp.zeros((h_pad, LANES), wdt).at[:hidden, 0].set(w2[0].astype(wdt))
    b2_r = jnp.zeros((1, LANES), jnp.float32).at[0, 0].set(b2[0].astype(jnp.float32))
    return w1_t, b1_r, w2_t, b2_r


def loupe_cls_head(x, params, *, block_rows=512, vmem_limit_bytes=None):
    """x: (..., input_dim) -> (..., 1) logits. `params` comes from prepare_params()."""
    w1_t, b1_r, w2_t, b2_r = params
    orig_shape = x.shape
    input_dim = orig_shape[-1]
    assert w1_t.shape[0] == input_dim, (w1_t.shape, input_dim)
    h_pad = w1_t.shape[1]
    out_dtype = x.dtype

    # No wrapper-side astype: the dtype cast happens inside the kernel on the VMEM tile.
    x2d = x.reshape(-1, input_dim)
    n_rows = x2d.shape[0]

    vmem_cap, num_cores = _tpu_caps()
    # ~3/4 of physical VMEM: ~48 MiB on v7x (64 MiB/TC), ~96 MiB on v5e/v6e (128 MiB/TC).
    vmem_budget = (vmem_limit_bytes if vmem_limit_bytes is not None
                   else (vmem_cap // 4) * 3)

    w_bytes = (w1_t.size * w1_t.dtype.itemsize + b1_r.size * b1_r.dtype.itemsize
               + w2_t.size * w2_t.dtype.itemsize + b2_r.size * b2_r.dtype.itemsize)

    def vmem_usage(tm):
        x_b = 2 * tm * input_dim * x2d.dtype.itemsize           # double-buffered x tile
        o_b = 2 * tm * LANES * jnp.dtype(out_dtype).itemsize    # double-buffered out tile
        h_b = tm * h_pad * 4                                      # f32 hidden activation
        return x_b + o_b + h_b + w_bytes                          # weights single-buffered

    # Row-tile selection: whole problem in one tile when small; on 2-TC chips split
    # medium batches into >=2 "parallel" grid steps so both TensorCores get work.
    if n_rows <= block_rows:
        tm = n_rows
        if num_cores >= 2 and n_rows > 256:
            tm = _round_up(pl.cdiv(n_rows, num_cores), 8)
    else:
        tm = block_rows
    # Shrink the row tile if it does not fit the per-generation VMEM budget.
    while tm > 8 and vmem_usage(tm) > vmem_budget:
        tm = max(8, _round_up(tm // 2, 8))

    grid = (pl.cdiv(n_rows, tm),)

    flops = 2 * n_rows * input_dim * h_pad + 2 * n_rows * h_pad * LANES
    bytes_accessed = (x2d.size * x2d.dtype.itemsize + w_bytes
                      + n_rows * LANES * jnp.dtype(out_dtype).itemsize)
    cost = pl.CostEstimate(flops=int(flops),
                           transcendentals=int(n_rows * h_pad),
                           bytes_accessed=int(bytes_accessed))

    # Constant block index -> fetched once, kept resident; single-buffered (Buffered(1))
    # because re-buffering an unchanging block only burns VMEM.
    resident = pl.Buffered(1)

    out = pl.pallas_call(
        cls_head_kernel,
        out_shape=jax.ShapeDtypeStruct((n_rows, LANES), out_dtype),
        grid_spec=pltpu.PrefetchScalarGridSpec(
            num_scalar_prefetch=0,
            grid=grid,
            in_specs=[
                pl.BlockSpec((tm, input_dim), lambda i: (i, 0)),
                pl.BlockSpec((input_dim, h_pad), lambda i: (0, 0), pipeline_mode=resident),
                pl.BlockSpec((1, h_pad), lambda i: (0, 0), pipeline_mode=resident),
                pl.BlockSpec((h_pad, LANES), lambda i: (0, 0), pipeline_mode=resident),
                pl.BlockSpec((1, LANES), lambda i: (0, 0), pipeline_mode=resident),
            ],
            out_specs=pl.BlockSpec((tm, LANES), lambda i: (i, 0)),
        ),
        compiler_params=pltpu.CompilerParams(
            dimension_semantics=("parallel",),
            vmem_limit_bytes=int(min(vmem_budget, vmem_cap)),
        ),
        cost_estimate=cost,
    )(x2d, w1_t, b1_r, w2_t, b2_r)

    # Lane-dense output slab: real logit is column 0; columns 1..127 are zeros.
    return out[:, :1].reshape(orig_shape[:-1] + (1,))


def init_params(key, input_dim, hidden_dim):
    """PyTorch nn.Linear-like uniform init, in PyTorch (out, in) convention."""
    k1, k2, k3, k4 = jax.random.split(key, 4)
    bound1 = 1.0 / math.sqrt(input_dim)
    bound2 = 1.0 / math.sqrt(hidden_dim)
    w1 = jax.random.uniform(k1, (hidden_dim, input_dim), jnp.float32, -bound1, bound1)
    b1 = jax.random.uniform(k2, (hidden_dim,), jnp.float32, -bound1, bound1)
    w2 = jax.random.uniform(k3, (1, hidden_dim), jnp.float32, -bound2, bound2)
    b2 = jax.random.uniform(k4, (1,), jnp.float32, -bound2, bound2)
    return w1, b1, w2, b2


def reference(x, w1, b1, w2, b2):
    h = x @ w1.T + b1
    h = _gelu_exact(h)
    return h @ w2.T + b2


if __name__ == "__main__":
    key = jax.random.PRNGKey(0)
    batch, seq, input_dim, hidden_dim = 2, 8, 32, 32

    kx, kp = jax.random.split(key)
    x = jax.random.normal(kx, (batch, seq, input_dim), jnp.float32)
    w1, b1, w2, b2 = init_params(kp, input_dim, hidden_dim)
    ref = reference(x, w1, b1, w2, b2)

    # Default bf16 compute path (MXU-native operands, f32 accumulation) -> loose tolerance.
    # NOTE: this intentionally diverges slightly from the f32 PyTorch forward; use
    # compute_dtype=jnp.float32 below for tight parity.
    params_bf16 = prepare_params(w1, b1, w2, b2)
    out_bf16 = jax.block_until_ready(loupe_cls_head(x, params_bf16))
    assert out_bf16.shape == (batch, seq, 1), out_bf16.shape
    assert jnp.allclose(out_bf16, ref, atol=5e-2, rtol=5e-2), \
        float(jnp.max(jnp.abs(out_bf16 - ref)))

    # f32 compute path (matches PyTorch's exact-GELU f32 forward).
    params_f32 = prepare_params(w1, b1, w2, b2, compute_dtype=jnp.float32)
    out_f32 = jax.block_until_ready(loupe_cls_head(x, params_f32))
    assert out_f32.shape == (batch, seq, 1), out_f32.shape
    assert jnp.allclose(out_f32, ref, atol=1e-5, rtol=1e-5), \
        float(jnp.max(jnp.abs(out_f32 - ref)))

    print("KERNEL_OK")
</pallas_src>

<mosaic_0001>
module attributes {stable_mosaic.version = 11 : i64} {
  func.func @cls_head_kernel(%arg0: i32, %arg1: memref<16x32xf32, #tpu.memory_space<vmem>>, %arg2: memref<32x128xbf16, #tpu.memory_space<vmem>>, %arg3: memref<1x128xf32, #tpu.memory_space<vmem>>, %arg4: memref<128x128xbf16, #tpu.memory_space<vmem>>, %arg5: memref<1x128xf32, #tpu.memory_space<vmem>>, %arg6: memref<16x128xf32, #tpu.memory_space<vmem>>) attributes {dimension_semantics = [#tpu.dimension_semantics<parallel>], iteration_bounds = array<i64: 1>, scalar_prefetch = 0 : i64, scratch_operands = 0 : i64, tpu.core_type = #tpu.core_type<tc>, window_params = [{transform_indices = @transform_0, window_bounds = array<i64: 16, 32>}, {pipeline_mode = #tpu.pipeline_mode<synchronous>, transform_indices = @transform_1, window_bounds = array<i64: 32, 128>}, {pipeline_mode = #tpu.pipeline_mode<synchronous>, transform_indices = @transform_2, window_bounds = array<i64: 1, 128>}, {pipeline_mode = #tpu.pipeline_mode<synchronous>, transform_indices = @transform_3, window_bounds = array<i64: 128, 128>}, {pipeline_mode = #tpu.pipeline_mode<synchronous>, transform_indices = @transform_4, window_bounds = array<i64: 1, 128>}, {transform_indices = @transform_5, window_bounds = array<i64: 16, 128>}]} {
    %c0 = arith.constant 0 : index
    %c0_0 = arith.constant 0 : index
    %0 = vector.load %arg1[%c0, %c0_0] : memref<16x32xf32, #tpu.memory_space<vmem>>, vector<16x32xf32>
    %1 = arith.truncf %0 : vector<16x32xf32> to vector<16x32xbf16>
    %c0_1 = arith.constant 0 : index
    %c0_2 = arith.constant 0 : index
    %2 = vector.load %arg2[%c0_1, %c0_2] : memref<32x128xbf16, #tpu.memory_space<vmem>>, vector<32x128xbf16>
    %cst = arith.constant dense<0.000000e+00> : vector<16x128xf32>
    %3 = tpu.matmul %1, %2, %cst {dimension_numbers = #tpu.dot_dimension_numbers<[1], [0], [0], [1], [0, 0, 1, 1], [], []>} : vector<16x32xbf16>, vector<32x128xbf16>, vector<16x128xf32> -> vector<16x128xf32>
    %c0_3 = arith.constant 0 : index
    %c0_4 = arith.constant 0 : index
    %4 = vector.load %arg3[%c0_3, %c0_4] : memref<1x128xf32, #tpu.memory_space<vmem>>, vector<1x128xf32>
    %5 = vector.broadcast %4 : vector<1x128xf32> to vector<16x128xf32>
    %6 = arith.addf %3, %5 : vector<16x128xf32>
    %cst_5 = arith.constant 5.000000e-01 : f32
    %7 = vector.broadcast %cst_5 : f32 to vector<16x128xf32>
    %8 = arith.mulf %7, %6 : vector<16x128xf32>
    %cst_6 = arith.constant 0.707106769 : f32
    %9 = vector.broadcast %cst_6 : f32 to vector<16x128xf32>
    %10 = arith.mulf %6, %9 : vector<16x128xf32>
    %11 = math.erf %10 : vector<16x128xf32>
    %cst_7 = arith.constant 1.000000e+00 : f32
    %12 = vector.broadcast %cst_7 : f32 to vector<16x128xf32>
    %13 = arith.addf %12, %11 : vector<16x128xf32>
    %14 = arith.mulf %8, %13 : vector<16x128xf32>
    %15 = arith.truncf %14 : vector<16x128xf32> to vector<16x128xbf16>
    %c0_8 = arith.constant 0 : index
    %c0_9 = arith.constant 0 : index
    %16 = vector.load %arg4[%c0_8, %c0_9] : memref<128x128xbf16, #tpu.memory_space<vmem>>, vector<128x128xbf16>
    %cst_10 = arith.constant dense<0.000000e+00> : vector<16x128xf32>
    %17 = tpu.matmul %15, %16, %cst_10 {dimension_numbers = #tpu.dot_dimension_numbers<[1], [0], [0], [1], [0, 0, 1, 1], [], []>} : vector<16x128xbf16>, vector<128x128xbf16>, vector<16x128xf32> -> vector<16x128xf32>
    %c0_11 = arith.constant 0 : index
    %c0_12 = arith.constant 0 : index
    %18 = vector.load %arg5[%c0_11, %c0_12] : memref<1x128xf32, #tpu.memory_space<vmem>>, vector<1x128xf32>
    %19 = vector.broadcast %18 : vector<1x128xf32> to vector<16x128xf32>
    %20 = arith.addf %17, %19 : vector<16x128xf32>
    %c0_13 = arith.constant 0 : index
    %c0_14 = arith.constant 0 : index
    %21 = vector.load %arg6[%c0_13, %c0_14] : memref<16x128xf32, #tpu.memory_space<vmem>>, vector<16x128xf32>
    tpu.vector_store %arg6[%c0_13, %c0_14], %20 {strides = array<i32>} : memref<16x128xf32, #tpu.memory_space<vmem>>, vector<16x128xf32>,
    return
  }
  func.func @transform_0(%arg0: i32) -> (i32, i32) {
    %c0_i32 = arith.constant 0 : i32
    %c0_i32_0 = arith.constant 0 : i32
    return %arg0, %c0_i32 : i32, i32
  }
  func.func @transform_1(%arg0: i32) -> (i32, i32) {
    %c0_i32 = arith.constant 0 : i32
    %c0_i32_0 = arith.constant 0 : i32
    %c0_i32_1 = arith.constant 0 : i32
    return %c0_i32, %c0_i32_0 : i32, i32
  }
  func.func @transform_2(%arg0: i32) -> (i32, i32) {
    %c0_i32 = arith.constant 0 : i32
    %c0_i32_0 = arith.constant 0 : i32
    %c0_i32_1 = arith.constant 0 : i32
    return %c0_i32, %c0_i32_0 : i32, i32
  }
  func.func @transform_3(%arg0: i32) -> (i32, i32) {
    %c0_i32 = arith.constant 0 : i32
    %c0_i32_0 = arith.constant 0 : i32
    %c0_i32_1 = arith.constant 0 : i32
    return %c0_i32, %c0_i32_0 : i32, i32
  }
  func.func @transform_4(%arg0: i32) -> (i32, i32) {
    %c0_i32 = arith.constant 0 : i32
    %c0_i32_0 = arith.constant 0 : i32
    %c0_i32_1 = arith.constant 0 : i32
    return %c0_i32, %c0_i32_0 : i32, i32
  }
  func.func @transform_5(%arg0: i32) -> (i32, i32) {
    %c0_i32 = arith.constant 0 : i32
    %c0_i32_0 = arith.constant 0 : i32
    return %arg0, %c0_i32 : i32, i32
  }
}

</mosaic_0001>

<llo_original>
// kernel: tpu_custom_call.1
$region0: #{tpu_custom_call.1}
  #allocation0 [shape = 'u32[]', space=smem, size = 0x4, offset = 0x4, fixed_abs, tag = 'smem constant byte address 0x4 - core index']
  #allocation1 [shape = 'u32[72,128]{1,0:T(1,128)}', space=vmem, size = 0x9000, scoped, tag = 'internal scratch']
  %s0 = inlined_call_operand.hbm [shape: f32[16,32], index: 0, kind: input, shape index: {}]
  %s1 = inlined_call_operand.hbm [shape: bf16[32,128], index: 1, kind: input, shape index: {}]
  %s2 = inlined_call_operand.vmem [shape: f32[1,128], index: 2, kind: input, shape index: {}]
  %s3 = inlined_call_operand.hbm [shape: bf16[128,128], index: 3, kind: input, shape index: {}]
  %s4 = inlined_call_operand.vmem [shape: f32[1,128], index: 4, kind: input, shape index: {}]
  %s5 = inlined_call_operand.hbm [shape: f32[16,128], index: 5, kind: output, shape index: {}]
  %s6 = sld [smem:[#allocation0]]
  $region42: #{tpu_custom_call.1} parent=0
    _
  %s8 = ssub.s32 1, %s6
  %s9 = scalar_select 0, %s8, %s6
  $region1: #{tpu_custom_call.1} parent=0
    #allocation2 [shape = 'u8[8192]{0}', space=vmem, size = 0x2000, scoped, tag = 'input window, operand 0, single buffered']
    #allocation3 [shape = 's32[1]{0}', space=sflag, size = 0x4, scoped, tag = 'scoped memory for tpu_custom_call.1']
    #allocation4 [shape = 's32[1]{0}', space=sflag, size = 0x4, scoped, tag = 'scoped memory for tpu_custom_call.1']
    #allocation5 [shape = 'u8[8192]{0}', space=vmem, size = 0x2000, scoped, tag = 'input window, operand 1, single buffered']
    #allocation6 [shape = 's32[1]{0}', space=sflag, size = 0x4, scoped, tag = 'scoped memory for tpu_custom_call.1']
    #allocation7 [shape = 'u8[32768]{0}', space=vmem, size = 0x8000, scoped, tag = 'input window, operand 3, single buffered']
    #allocation8 [shape = 'u8[8192]{0}', space=vmem, size = 0x2000, scoped, tag = 'output window, operand 0, single buffered']
    %10 = vsyncpa [#allocation3], 0
    %11 = vsyncpa [#allocation6], 0
    %12 = vsyncpa [#allocation4], 0
    // Predicated region
    $region2: #{tpu_custom_call.1} parent=1 // pred_check
      _
    $region3: #{tpu_custom_call.1} parent=1 // pred_check_branch
      %14 = sbr.rel (0) target = $region5
    $region4: #{tpu_custom_call.1} parent=1 // pred_region
      %16 = vsyncadd [#allocation3], 0
      %s17 = sshll.u32 %s0, 4
      %s18 = int_to_ptr.hbm [resolvable:$true] %s17
      %s19 = sshll.u32 [#allocation2], 4
      %s20 = int_to_ptr.vmem [resolvable:$true] %s19
      %25 = dma.hbm_to_vmem [thread:$0]  %s18, 256, %s20, [#allocation3], 128, 128, 8
    $region5: #{tpu_custom_call.1} parent=1 // pred_fallthru
      _
    // Predicated region
    $region6: #{tpu_custom_call.1} parent=1 // pred_check
      _
    $region7: #{tpu_custom_call.1} parent=1 // pred_check_branch
      %27 = sbr.rel (0) target = $region9
    $region8: #{tpu_custom_call.1} parent=1 // pred_region
      %29 = vsyncadd [#allocation6], 0
      %s30 = sshll.u32 %s1, 4
      %s31 = int_to_ptr.hbm [resolvable:$true] %s30
      %s32 = sshll.u32 [#allocation5], 4
      %s33 = int_to_ptr.vmem [resolvable:$true] %s32
      %38 = dma.hbm_to_vmem [thread:$0]  %s31, 256, %s33, [#allocation6], 64, 64, 4
    $region9: #{tpu_custom_call.1} parent=1 // pred_fallthru
      _
    // Predicated region
    $region10: #{tpu_custom_call.1} parent=1 // pred_check
      _
    $region11: #{tpu_custom_call.1} parent=1 // pred_check_branch
      %40 = sbr.rel (0) target = $region13
    $region12: #{tpu_custom_call.1} parent=1 // pred_region
      _
    $region13: #{tpu_custom_call.1} parent=1 // pred_fallthru
      _
    // Predicated region
    $region14: #{tpu_custom_call.1} parent=1 // pred_check
      _
    $region15: #{tpu_custom_call.1} parent=1 // pred_check_branch
      %42 = sbr.rel (0) target = $region17
    $region16: #{tpu_custom_call.1} parent=1 // pred_region
      %44 = vsyncadd [#allocation6], 0
      %s45 = sshll.u32 %s3, 4
      %s46 = int_to_ptr.hbm [resolvable:$true] %s45
      %s47 = sshll.u32 [#allocation7], 4
      %s48 = int_to_ptr.vmem [resolvable:$true] %s47
      %53 = dma.hbm_to_vmem [thread:$0]  %s46, 1024, %s48, [#allocation6], 64, 64, 4
    $region17: #{tpu_custom_call.1} parent=1 // pred_fallthru
      _
    // Predicated region
    $region18: #{tpu_custom_call.1} parent=1 // pred_check
      _
    $region19: #{tpu_custom_call.1} parent=1 // pred_check_branch
      %55 = sbr.rel (0) target = $region21
    $region20: #{tpu_custom_call.1} parent=1 // pred_region
      _
    $region21: #{tpu_custom_call.1} parent=1 // pred_fallthru
      _
    // Predicated region
    $region22: #{tpu_custom_call.1} parent=1 // pred_check
      _
    $region23: #{tpu_custom_call.1} parent=1 // pred_check_branch
      %57 = sbr.rel (0) target = $region25
    $region24: #{tpu_custom_call.1} parent=1 // pred_region
      %59 = dma.done [#allocation3], 256
    $region25: #{tpu_custom_call.1} parent=1 // pred_fallthru
      _
    // Predicated region
    $region26: #{tpu_custom_call.1} parent=1 // pred_check
      _
    $region27: #{tpu_custom_call.1} parent=1 // pred_check_branch
      %61 = sbr.rel (0) target = $region29
    $region28: #{tpu_custom_call.1} parent=1 // pred_region
      %63 = dma.done [#allocation6], 256
    $region29: #{tpu_custom_call.1} parent=1 // pred_fallthru
      _
    // Predicated region
    $region30: #{tpu_custom_call.1} parent=1 // pred_check
      _
    $region31: #{tpu_custom_call.1} parent=1 // pred_check_branch
      %65 = sbr.rel (0) target = $region33
    $region32: #{tpu_custom_call.1} parent=1 // pred_region
      %67 = dma.done [#allocation6], 1024
    $region33: #{tpu_custom_call.1} parent=1 // pred_fallthru
      _
    %v69 = vld [vmem:[#allocation2] sm:$0xff]
    %v70 = vld [vmem:[#allocation2 + $0x8] sm:$0xff]
    %v71 = vpack.c.bf16 %v70, %v69
    %v72 = vld [vmem:[#allocation5] sm:$0xf]
    %v73 = vld [vmem:[#allocation5 + $0x4] sm:$0xf]
    %v74 = vld [vmem:[#allocation5 + $0x8] sm:$0xf]
    %v75 = vld [vmem:[#allocation5 + $0xc] sm:$0xf]
    %v76 = vld [vmem:[%s2] sm:$0x1]
    %v78 = vperm.slane %v76, 0
    %v84 = vunpack.c.l.b16 %v72
    %v85 = vunpack.c.l.b16 %v73
    %v86 = vunpack.c.l.b16 %v74
    %v87 = vunpack.c.l.b16 %v75
    %v88 = vpack.c.b16 %v85, %v84
    %v89 = vpack.c.b16 %v87, %v86
    %vm92 = vcmask 261120
    %v94 = vsel %vm92, %v71, 0
    %96 = vmatpush.bf16.msra.mxu0 0
    %97 = vmatpush.bf16.msra.mxu0 0
    %98 = vmatpush.bf16.msra.mxu0 0
    %99 = vmatpush.bf16.msra.mxu0 0
    %100 = vmatpush.bf16.msra.mxu0 0
    %101 = vmatpush.bf16.msra.mxu0 0
    %102 = vmatpush.bf16.msra.mxu0 %v89
    %103 = vmatpush.bf16.msra.mxu0 %v88
    %104 = vmatmul.bf16.gmra.mxu0 %v94
    %v105 = vpop.f32.mrf.mxu0
    %v106 = vadd.f32 %v78, %v105
    %v107 = vpop.f32.mrf.mxu0
    %v108 = vadd.f32 %v78, %v107
    %109 = vdwg.mxu0
    %v110 = vmul.f32 %v106, 0.5
    %v111 = vmul.f32 %v108, 0.5
    %v112 = vmul.f32 %v106, 0.70710677
    %v113 = vmul.f32 %v108, 0.70710677
    %v114 = vmul.f32 %v112, %v112
    %v115 = vmin.f32 16.0, %v114
    %v116 = vmul.f32 %v115, 2.1237322e-06
    %v117 = vadd.f32 %v116, 0.00028619796
    %v118 = vmul.f32 %v115, %v117
    %v119 = vadd.f32 %v118, 0.0036580483
    %v120 = vmul.f32 %v115, %v119
    %v121 = vadd.f32 %v120, 0.05243302
    %v122 = vmul.f32 %v115, %v121
    %v123 = vadd.f32 %v122, 0.18741608
    %v124 = vmul.f32 %v115, %v123
    %v125 = vadd.f32 %v124, 1.1283791
    %v126 = vmul.f32 %v112, %v125
    %v127 = vmul.f32 %v115, 3.8918573e-05
    %v128 = vadd.f32 %v127, 0.001143296
    %v129 = vmul.f32 %v115, %v128
    %v130 = vadd.f32 %v129, 0.014752088
    %v131 = vmul.f32 %v115, %v130
    %v132 = vadd.f32 %v131, 0.112945676
    %v133 = vmul.f32 %v115, %v132
    %v134 = vadd.f32 %v133, 0.4994258
    %v135 = vmul.f32 %v115, %v134
    %v136 = vadd.f32 %v135, 1.0
    %v137 = vrcp.pop %v136
    %v138 = vmul.f32 %v136, %v137
    %v139 = vsub.f32 1.0, %v138
    %v140 = vmul.f32 %v137, %v139
    %v141 = vadd.f32 %v137, %v140
    %vm142 = vweird.f32 %v136
    %vm143 = vweird.f32 %v137
    %vm144 = vmor %vm142, %vm143
    %v145 = vsel %vm144, %v137, %v141
    %v146 = vand.u32 2147483647, %v136
    %vm147 = vcmp.eq.f32.partialorder %v146, 8.507059e+37
    %v148 = vand.u32 %v136, 2147483648
    %v149 = vor.u32 1.1754944e-38, %v148
    %v150 = vsel %vm147, %v149, %v145
    %v151 = vmul.f32 %v126, %v150
    %v152 = vmin.f32 %v151, 1.0
    %v153 = vmax.f32 %v152, -1.0
    %v154 = vmul.f32 %v113, %v113
    %v155 = vmin.f32 16.0, %v154
    %v156 = vmul.f32 %v155, 2.1237322e-06
    %v157 = vadd.f32 %v156, 0.00028619796
    %v158 = vmul.f32 %v155, %v157
    %v159 = vadd.f32 %v158, 0.0036580483
    %v160 = vmul.f32 %v155, %v159
    %v161 = vadd.f32 %v160, 0.05243302
    %v162 = vmul.f32 %v155, %v161
    %v163 = vadd.f32 %v162, 0.18741608
    %v164 = vmul.f32 %v155, %v163
    %v165 = vadd.f32 %v164, 1.1283791
    %v166 = vmul.f32 %v113, %v165
    %v167 = vmul.f32 %v155, 3.8918573e-05
    %v168 = vadd.f32 %v167, 0.001143296
    %v169 = vmul.f32 %v155, %v168
    %v170 = vadd.f32 %v169, 0.014752088
    %v171 = vmul.f32 %v155, %v170
    %v172 = vadd.f32 %v171, 0.112945676
    %v173 = vmul.f32 %v155, %v172
    %v174 = vadd.f32 %v173, 0.4994258
    %v175 = vmul.f32 %v155, %v174
    %v176 = vadd.f32 %v175, 1.0
    %v177 = vrcp.pop %v176
    %v178 = vmul.f32 %v176, %v177
    %v179 = vsub.f32 1.0, %v178
    %v180 = vmul.f32 %v177, %v179
    %v181 = vadd.f32 %v177, %v180
    %vm182 = vweird.f32 %v176
    %vm183 = vweird.f32 %v177
    %vm184 = vmor %vm182, %vm183
    %v185 = vsel %vm184, %v177, %v181
    %v186 = vand.u32 2147483647, %v176
    %vm187 = vcmp.eq.f32.partialorder %v186, 8.507059e+37
    %v188 = vand.u32 %v176, 2147483648
    %v189 = vor.u32 1.1754944e-38, %v188
    %v190 = vsel %vm187, %v189, %v185
    %v191 = vmul.f32 %v166, %v190
    %v192 = vmin.f32 %v191, 1.0
    %v193 = vmax.f32 %v192, -1.0
    %v194 = vadd.f32 %v153, 1.0
    %v195 = vadd.f32 %v193, 1.0
    %v196 = vmul.f32 %v110, %v194
    %v197 = vmul.f32 %v111, %v195
    %v198 = vpack.c.bf16 %v197, %v196
    %v199 = vld [vmem:[#allocation7] sm:$0xf]
    %v200 = vld [vmem:[#allocation7 + $0x4] sm:$0xf]
    %v201 = vld [vmem:[#allocation7 + $0x8] sm:$0xf]
    %v202 = vld [vmem:[#allocation7 + $0xc] sm:$0xf]
    %v203 = vld [vmem:[#allocation7 + $0x10] sm:$0xf]
    %v204 = vld [vmem:[#allocation7 + $0x14] sm:$0xf]
    %v205 = vld [vmem:[#allocation7 + $0x18] sm:$0xf]
    %v206 = vld [vmem:[#allocation7 + $0x1c] sm:$0xf]
    %v207 = vld [vmem:[#allocation7 + $0x20] sm:$0xf]
    %v208 = vld [vmem:[#allocation7 + $0x24] sm:$0xf]
    %v209 = vld [vmem:[#allocation7 + $0x28] sm:$0xf]
    %v210 = vld [vmem:[#allocation7 + $0x2c] sm:$0xf]
    %v211 = vld [vmem:[#allocation7 + $0x30] sm:$0xf]
    %v212 = vld [vmem:[#allocation7 + $0x34] sm:$0xf]
    %v213 = vld [vmem:[#allocation7 + $0x38] sm:$0xf]
    %v214 = vld [vmem:[#allocation7 + $0x3c] sm:$0xf]
    %v215 = vld [vmem:[%s4] sm:$0x1]
    %v217 = vperm.slane %v215, 0
    %v235 = vunpack.c.l.b16 %v199
    %v236 = vunpack.c.l.b16 %v200
    %v237 = vunpack.c.l.b16 %v201
    %v238 = vunpack.c.l.b16 %v202
    %v239 = vunpack.c.l.b16 %v203
    %v240 = vunpack.c.l.b16 %v204
    %v241 = vunpack.c.l.b16 %v205
    %v242 = vunpack.c.l.b16 %v206
    %v243 = vunpack.c.l.b16 %v207
    %v244 = vunpack.c.l.b16 %v208
    %v245 = vunpack.c.l.b16 %v209
    %v246 = vunpack.c.l.b16 %v210
    %v247 = vunpack.c.l.b16 %v211
    %v248 = vunpack.c.l.b16 %v212
    %v249 = vunpack.c.l.b16 %v213
    %v250 = vunpack.c.l.b16 %v214
    %v251 = vpack.c.b16 %v236, %v235
    %v252 = vpack.c.b16 %v238, %v237
    %v253 = vpack.c.b16 %v240, %v239
    %v254 = vpack.c.b16 %v242, %v241
    %v255 = vpack.c.b16 %v244, %v243
    %v256 = vpack.c.b16 %v246, %v245
    %v257 = vpack.c.b16 %v248, %v247
    %v258 = vpack.c.b16 %v250, %v249
    %267 = vmatpush.bf16.msra.mxu0 %v258
    %268 = vmatpush.bf16.msra.mxu0 %v257
    %269 = vmatpush.bf16.msra.mxu0 %v256
    %270 = vmatpush.bf16.msra.mxu0 %v255
    %271 = vmatpush.bf16.msra.mxu0 %v254
    %272 = vmatpush.bf16.msra.mxu0 %v253
    %273 = vmatpush.bf16.msra.mxu0 %v252
    %274 = vmatpush.bf16.msra.mxu0 %v251
    %275 = vmatmul.bf16.gmra.mxu0 %v198
    %v276 = vpop.f32.mrf.mxu0
    %v277 = vadd.f32 %v217, %v276
    %v278 = vpop.f32.mrf.mxu0
    %v279 = vadd.f32 %v217, %v278
    %280 = vdwg.mxu0
    %281 = vst [vmem:[#allocation8] sm:$0xff] %v277
    %282 = vst [vmem:[#allocation8 + $0x8] sm:$0xff] %v279
    // Predicated region
    $region34: #{tpu_custom_call.1} parent=1 // pred_check
      _
    $region35: #{tpu_custom_call.1} parent=1 // pred_check_branch
      %284 = sbr.rel (0) target = $region37
    $region36: #{tpu_custom_call.1} parent=1 // pred_region
      %286 = vsyncadd [#allocation4], 0
      %s287 = sshll.u32 [#allocation8], 4
      %s288 = int_to_ptr.vmem [resolvable:$true] %s287
      %s289 = sshll.u32 %s5, 4
      %s290 = int_to_ptr.hbm [resolvable:$true] %s289
      %295 = dma.vmem_to_hbm [thread:$0]  %s288, 256, %s290, [#allocation4], 128, 128, 8
    $region37: #{tpu_custom_call.1} parent=1 // pred_fallthru
      _
    // Predicated region
    $region38: #{tpu_custom_call.1} parent=1 // pred_check
      _
    $region39: #{tpu_custom_call.1} parent=1 // pred_check_branch
      %297 = sbr.rel (0) target = $region41
    $region40: #{tpu_custom_call.1} parent=1 // pred_region
      %299 = dma.done [#allocation4], 256
    $region41: #{tpu_custom_call.1} parent=1 // pred_fallthru
      _
    %300 = vsyncpa [#allocation3], 1
    %301 = vsyncpa [#allocation6], 1
    %302 = vsyncpa [#allocation4], 1

</llo_original>
